<compile_context>
chip_gen: v7x
topology: tpu7x:2x2x1
jax: 0.10.0
libtpu: 0.0.40
codegen_flags: <defaults>
</compile_context>

<pallas_src>
import functools
import math

import jax
import jax.numpy as jnp
from jax import lax
from jax.experimental import pallas as pl
from jax.experimental.pallas import tpu as pltpu

_LANE = 128
_OUT_SUB = 8        # sublane rows of the (tiny) f32 per-sample output slots


def _cdiv(a: int, b: int) -> int:
    return -(-a // b)


def _net2vec_kernel(out_ref, tgt_ref, res_ref, *, b, thresh, h_size, w_size,
                    th, tw, mask_h, mask_w):
    """One (bt, th, tw) tile: accumulate per-sample sums of the Net2Vec term."""
    k = pl.program_id(2)                       # w (reduction) axis -- innermost

    @pl.when(k == 0)
    def _():
        res_ref[...] = jnp.zeros_like(res_ref)

    # Stream native dtype from HBM; upcast per block on the VPU (hidden under DMA).
    o = out_ref[...].astype(jnp.float32)       # (bt, th, tw)
    t = tgt_ref[...].astype(jnp.float32)

    fg = t > thresh                            # binarized targets (strict '>')
    # b*t*o + (1-b)*(1-t)*(1-o)  with t in {0,1}  ==  where(t, b*o, (1-b)*(1-o))
    term = jnp.where(fg, b * o, (1.0 - b) * (1.0 - o))

    # In-kernel tail masks for the last h / w tile (replaces the old jnp.pad pass).
    # Emitted only when the shape actually needs them (static Python check).
    if mask_h:
        rows = pl.program_id(1) * th + lax.broadcasted_iota(jnp.int32, (th, 1), 0)
        term = jnp.where((rows < h_size)[None], term, 0.0)
    if mask_w:
        cols = k * tw + lax.broadcasted_iota(jnp.int32, (1, tw), 1)
        term = jnp.where((cols < w_size)[None], term, 0.0)

    partial = jnp.sum(term, axis=2, keepdims=True)      # (bt, th, 1)  lane reduce
    partial = jnp.sum(partial, axis=1, keepdims=True)   # (bt, 1, 1)   sublane reduce
    res_ref[...] += partial                             # splat into (bt, 8, 128) slot


def net2vec_loss_pallas(outputs, targets, *, factor_pos_class=0.5,
                        target_thresh=0.0, reduction="mean",
                        block_elems=None, max_lane_tile=4096):
    """Net2Vec loss with batch reduction, computed in a Pallas TPU kernel.

    outputs/targets: arrays of the same shape; 1D / 2D (no batch) or >=3D
    (batch = leading dims, area = last two dims), values in [0, 1].
    `block_elems` / `max_lane_tile` are tuning/testing knobs only.
    Returns a float32 scalar (for mean/sum reductions).
    """
    if outputs.shape != targets.shape:
        raise ValueError(f"Outputs {outputs.shape} and targets {targets.shape} "
                         "have different sizes!")
    if outputs.ndim < 1:
        raise ValueError("Output dimension too small; must be at least 1D")
    if not 0.0 <= factor_pos_class <= 1.0:
        raise ValueError("factor_pos_class must be in [0,1]")

    shape, nd = outputs.shape, outputs.ndim

    # --- present the data as (b_flat, H, W) without moving it (leading-dim collapse
    # and unit-dim insertion are layout-preserving) ------------------------------
    if nd == 1:
        s = shape[0]
        if s >= _LANE and s % _LANE == 0:
            b_flat, H, W = 1, s // _LANE, _LANE       # dense sublanes for 1-D inputs
        else:
            # TODO(synk): odd 1-D sizes keep a single-row layout (edge case).
            b_flat, H, W = 1, 1, s
    elif nd == 2:
        b_flat, H, W = 1, shape[0], shape[1]
    else:
        b_flat, H, W = int(math.prod(shape[:-2])), shape[-2], shape[-1]

    out3 = outputs.reshape(b_flat, H, W)
    tgt3 = targets.reshape(b_flat, H, W)

    # --- tile selection: lane-dense DMAs, ~2 MiB per input buffer ----------------
    itemsize = jnp.dtype(outputs.dtype).itemsize
    sub = max(8, 32 // max(itemsize, 1))              # sublane multiple: 8 f32 / 16 bf16
    if block_elems is None:
        # ~2 MiB of input bytes per buffer; element cap keeps the in-kernel f32
        # temporaries bounded too (so total VMEM stays well under the 32 MiB limit).
        block_elems = min((2 * 1024 * 1024) // itemsize, 512 * 1024)

    tw = W if W <= max_lane_tile else max_lane_tile   # full width or 128-multiple
    n_w = _cdiv(W, tw)

    max_th = max(1, block_elems // tw)
    if H <= max_th or H <= sub:
        th = H                                        # full height per block
        bt = max(1, block_elems // max(1, th * tw))   # several samples per block
        bt = min(bt, b_flat)                          # no batch-dim padding needed
    else:
        th = max(sub, (max_th // sub) * sub)          # sublane-aligned h tiles
        bt = 1
    n_h = _cdiv(H, th)
    n_b = _cdiv(b_flat, bt)
    b_pad = n_b * bt

    mask_h = (H % th) != 0
    mask_w = (W % tw) != 0

    kernel = functools.partial(
        _net2vec_kernel, b=float(factor_pos_class), thresh=float(target_thresh),
        h_size=H, w_size=W, th=th, tw=tw, mask_h=mask_h, mask_w=mask_w)

    # True (un-padded) traffic so XLA schedules around this bandwidth-bound call.
    total = b_flat * H * W
    cost = pl.CostEstimate(
        flops=6 * total, transcendentals=0,
        bytes_accessed=2 * total * itemsize + b_pad * n_h * _OUT_SUB * _LANE * 4)

    res = pl.pallas_call(
        kernel,
        out_shape=jax.ShapeDtypeStruct((b_pad, n_h * _OUT_SUB, _LANE), jnp.float32),
        grid_spec=pltpu.PrefetchScalarGridSpec(
            num_scalar_prefetch=0,
            grid=(n_b, n_h, n_w),
            in_specs=[
                pl.BlockSpec((bt, th, tw), lambda i, j, k: (i, j, k)),
                pl.BlockSpec((bt, th, tw), lambda i, j, k: (i, j, k)),
            ],
            out_specs=pl.BlockSpec((bt, _OUT_SUB, _LANE), lambda i, j, k: (i, j, 0)),
        ),
        compiler_params=pltpu.CompilerParams(
            dimension_semantics=("parallel", "parallel", "arbitrary"),
            vmem_limit_bytes=32 * 1024 * 1024),
        cost_estimate=cost,
    )(out3, tgt3)

    # (b_pad, n_h*8, 128) -> per-sample loss: take slot (0, 0) of each (sample, h-block)
    # and sum over h blocks; batch-tail garbage rows are simply never read.
    per_sample = res[:b_flat].reshape(b_flat, n_h, _OUT_SUB, _LANE)[:, :, 0, 0]
    per_instance = -per_sample.sum(axis=1)                # (b_flat,) f32

    if nd <= 2:
        per_instance = per_instance[0]                    # scalar, like the torch ref
    else:
        per_instance = per_instance.reshape(shape[:-2])   # original batch dims

    if reduction in ("mean", None):
        return jnp.mean(per_instance)
    if reduction == "sum":
        return jnp.sum(per_instance)
    return reduction(per_instance)                        # custom callables run in JAX


def _net2vec_reference(outputs, targets, *, factor_pos_class=0.5,
                       target_thresh=0.0, reduction="mean"):
    """Pure-JAX reference mirroring the PyTorch forward pass."""
    o = outputs.astype(jnp.float32)
    t = (targets.astype(jnp.float32) > target_thresh).astype(jnp.float32)
    b = factor_pos_class
    axes = (-1,) if outputs.ndim == 1 else (-2, -1)
    per = -(b * t * o + (1.0 - b) * (1.0 - t) * (1.0 - o)).sum(axis=axes)
    return jnp.mean(per) if reduction == "mean" else jnp.sum(per)


if __name__ == "__main__":
    key = jax.random.PRNGKey(0)
    ks = jax.random.split(key, 8)

    # 1) Canonical batched masks (B, H, W), aligned shapes, float32, defaults.
    o1 = jax.random.uniform(ks[0], (2, 16, 16), dtype=jnp.float32)
    t1 = jax.random.uniform(ks[1], (2, 16, 16), dtype=jnp.float32)
    r1 = jax.block_until_ready(net2vec_loss_pallas(o1, t1))
    ref1 = _net2vec_reference(o1, t1)
    assert jnp.allclose(r1, ref1, rtol=1e-5, atol=1e-5), (r1, ref1)

    # 2) bf16 inputs, non-aligned H/W and batch, non-default factor / threshold, sum.
    o2 = jax.random.uniform(ks[2], (3, 20, 50), dtype=jnp.float32).astype(jnp.bfloat16)
    t2 = jax.random.uniform(ks[3], (3, 20, 50), dtype=jnp.float32).astype(jnp.bfloat16)
    r2 = jax.block_until_ready(net2vec_loss_pallas(
        o2, t2, factor_pos_class=0.3, target_thresh=0.5, reduction="sum"))
    ref2 = _net2vec_reference(o2, t2, factor_pos_class=0.3, target_thresh=0.5,
                              reduction="sum")
    assert jnp.allclose(r2, ref2, rtol=2e-2, atol=2e-2), (r2, ref2)

    # 3) Force a multi-tile grid with in-kernel h/w tail masks (no jnp.pad anywhere):
    #    grid (3 batch, 3 h-tiles, 2 w-tiles) via small test-only block override.
    o3 = jax.random.uniform(ks[4], (3, 20, 150), dtype=jnp.float32)
    t3 = jax.random.uniform(ks[5], (3, 20, 150), dtype=jnp.float32)
    r3 = jax.block_until_ready(net2vec_loss_pallas(
        o3, t3, factor_pos_class=0.7, target_thresh=0.25,
        block_elems=1024, max_lane_tile=128))
    ref3 = _net2vec_reference(o3, t3, factor_pos_class=0.7, target_thresh=0.25)
    assert jnp.allclose(r3, ref3, rtol=1e-4, atol=1e-4), (r3, ref3)

    # 4) Partial (non-dividing) batch block: batch 7 with a batch tile of 3.
    o4 = jax.random.uniform(ks[6], (7, 10, 40), dtype=jnp.float32)
    t4 = jax.random.uniform(ks[7], (7, 10, 40), dtype=jnp.float32)
    r4 = jax.block_until_ready(net2vec_loss_pallas(
        o4, t4, reduction="sum", block_elems=1200))
    ref4 = _net2vec_reference(o4, t4, reduction="sum")
    assert jnp.allclose(r4, ref4, rtol=1e-4, atol=1e-4), (r4, ref4)

    print("KERNEL_OK")
</pallas_src>

<mosaic_0001>
module attributes {stable_mosaic.version = 11 : i64} {
  func.func @_net2vec_kernel(%arg0: i32, %arg1: i32, %arg2: i32, %arg3: memref<2x16x16xf32, #tpu.memory_space<vmem>>, %arg4: memref<2x16x16xf32, #tpu.memory_space<vmem>>, %arg5: memref<2x8x128xf32, #tpu.memory_space<vmem>>) attributes {dimension_semantics = [#tpu.dimension_semantics<parallel>, #tpu.dimension_semantics<parallel>, #tpu.dimension_semantics<arbitrary>], iteration_bounds = array<i64: 1, 1, 1>, scalar_prefetch = 0 : i64, scratch_operands = 0 : i64, tpu.core_type = #tpu.core_type<tc>, window_params = [{transform_indices = @transform_0, window_bounds = array<i64: 2, 16, 16>}, {transform_indices = @transform_1, window_bounds = array<i64: 2, 16, 16>}, {transform_indices = @transform_2, window_bounds = array<i64: 2, 8, 128>}]} {
    %c0_i32 = arith.constant 0 : i32
    %0 = arith.cmpi eq, %arg2, %c0_i32 : i32
    %1 = arith.extui %0 : i1 to i32
    %c0_i32_0 = arith.constant 0 : i32
    %2 = arith.cmpi ne, %1, %c0_i32_0 : i32
    scf.if %2 {
      %cst_17 = arith.constant 0.000000e+00 : f32
      %22 = vector.broadcast %cst_17 : f32 to vector<2x8x128xf32>
      %c0_18 = arith.constant 0 : index
      %c0_19 = arith.constant 0 : index
      %c0_20 = arith.constant 0 : index
      %23 = vector.load %arg5[%c0_18, %c0_19, %c0_20] : memref<2x8x128xf32, #tpu.memory_space<vmem>>, vector<2x8x128xf32>
      tpu.vector_store %arg5[%c0_18, %c0_19, %c0_20], %22 {strides = array<i32>} : memref<2x8x128xf32, #tpu.memory_space<vmem>>, vector<2x8x128xf32>,
    } else {
    }
    %c0 = arith.constant 0 : index
    %c0_1 = arith.constant 0 : index
    %c0_2 = arith.constant 0 : index
    %3 = vector.load %arg3[%c0, %c0_1, %c0_2] : memref<2x16x16xf32, #tpu.memory_space<vmem>>, vector<2x16x16xf32>
    %c0_3 = arith.constant 0 : index
    %c0_4 = arith.constant 0 : index
    %c0_5 = arith.constant 0 : index
    %4 = vector.load %arg4[%c0_3, %c0_4, %c0_5] : memref<2x16x16xf32, #tpu.memory_space<vmem>>, vector<2x16x16xf32>
    %cst = arith.constant 0.000000e+00 : f32
    %5 = vector.broadcast %cst : f32 to vector<2x16x16xf32>
    %6 = arith.cmpf ogt, %4, %5 : vector<2x16x16xf32>
    %cst_6 = arith.constant 5.000000e-01 : f32
    %7 = vector.broadcast %cst_6 : f32 to vector<2x16x16xf32>
    %8 = arith.mulf %7, %3 : vector<2x16x16xf32>
    %cst_7 = arith.constant 1.000000e+00 : f32
    %9 = vector.broadcast %cst_7 : f32 to vector<2x16x16xf32>
    %10 = arith.subf %9, %3 : vector<2x16x16xf32>
    %cst_8 = arith.constant 5.000000e-01 : f32
    %11 = vector.broadcast %cst_8 : f32 to vector<2x16x16xf32>
    %12 = arith.mulf %11, %10 : vector<2x16x16xf32>
    %13 = arith.select %6, %8, %12 : vector<2x16x16xi1>, vector<2x16x16xf32>
    %cst_9 = arith.constant dense<0.000000e+00> : vector<2x16xf32>
    %14 = vector.multi_reduction <add>, %13, %cst_9 [2] : vector<2x16x16xf32> to vector<2x16xf32>
    %15 = vector.shape_cast %14 : vector<2x16xf32> to vector<2x16x1xf32>
    %cst_10 = arith.constant dense<0.000000e+00> : vector<2x1xf32>
    %16 = vector.multi_reduction <add>, %15, %cst_10 [1] : vector<2x16x1xf32> to vector<2x1xf32>
    %17 = vector.shape_cast %16 : vector<2x1xf32> to vector<2x1x1xf32>
    %c0_11 = arith.constant 0 : index
    %c0_12 = arith.constant 0 : index
    %c0_13 = arith.constant 0 : index
    %18 = vector.load %arg5[%c0_11, %c0_12, %c0_13] : memref<2x8x128xf32, #tpu.memory_space<vmem>>, vector<2x8x128xf32>
    %19 = vector.broadcast %17 : vector<2x1x1xf32> to vector<2x8x128xf32>
    %20 = arith.addf %18, %19 : vector<2x8x128xf32>
    %c0_14 = arith.constant 0 : index
    %c0_15 = arith.constant 0 : index
    %c0_16 = arith.constant 0 : index
    %21 = vector.load %arg5[%c0_14, %c0_15, %c0_16] : memref<2x8x128xf32, #tpu.memory_space<vmem>>, vector<2x8x128xf32>
    tpu.vector_store %arg5[%c0_14, %c0_15, %c0_16], %20 {strides = array<i32>} : memref<2x8x128xf32, #tpu.memory_space<vmem>>, vector<2x8x128xf32>,
    return
  }
  func.func @transform_0(%arg0: i32, %arg1: i32, %arg2: i32) -> (i32, i32, i32) {
    %c0_i32 = arith.constant 0 : i32
    return %arg0, %arg1, %arg2 : i32, i32, i32
  }
  func.func @transform_1(%arg0: i32, %arg1: i32, %arg2: i32) -> (i32, i32, i32) {
    %c0_i32 = arith.constant 0 : i32
    return %arg0, %arg1, %arg2 : i32, i32, i32
  }
  func.func @transform_2(%arg0: i32, %arg1: i32, %arg2: i32) -> (i32, i32, i32) {
    %c0_i32 = arith.constant 0 : i32
    %c0_i32_0 = arith.constant 0 : i32
    return %arg0, %arg1, %c0_i32 : i32, i32, i32
  }
}

</mosaic_0001>

<llo_original>
// kernel: tpu_custom_call.1
$region0: #{tpu_custom_call.1}
  #allocation0 [shape = 'u32[]', space=smem, size = 0x4, offset = 0x4, fixed_abs, tag = 'smem constant byte address 0x4 - core index']
  #allocation1 [shape = 'u32[144,128]{1,0:T(1,128)}', space=vmem, size = 0x12000, scoped, tag = 'internal scratch']
  %s0 = inlined_call_operand.hbm [shape: f32[2,16,16], index: 0, kind: input, shape index: {}]
  %s1 = inlined_call_operand.hbm [shape: f32[2,16,16], index: 1, kind: input, shape index: {}]
  %s2 = inlined_call_operand.hbm [shape: f32[2,8,128], index: 2, kind: output, shape index: {}]
  %s3 = sld [smem:[#allocation0]]
  $region30: #{tpu_custom_call.1} parent=0
    _
  %s5 = ssub.s32 1, %s3
  %s6 = scalar_select 0, %s5, %s3
  $region1: #{tpu_custom_call.1} parent=0
    #allocation2 [shape = 'u8[16384]{0}', space=vmem, size = 0x4000, scoped, tag = 'input window, operand 0, single buffered']
    #allocation3 [shape = 's32[1]{0}', space=sflag, size = 0x4, scoped, tag = 'scoped memory for tpu_custom_call.1']
    #allocation4 [shape = 's32[1]{0}', space=sflag, size = 0x4, scoped, tag = 'scoped memory for tpu_custom_call.1']
    #allocation5 [shape = 'u8[16384]{0}', space=vmem, size = 0x4000, scoped, tag = 'input window, operand 1, single buffered']
    #allocation6 [shape = 's32[1]{0}', space=sflag, size = 0x4, scoped, tag = 'scoped memory for tpu_custom_call.1']
    #allocation7 [shape = 'u8[8192]{0}', space=vmem, size = 0x2000, scoped, tag = 'output window, operand 0, single buffered']
    %7 = vsyncpa [#allocation3], 0
    %8 = vsyncpa [#allocation6], 0
    %9 = vsyncpa [#allocation4], 0
    // Predicated region
    $region2: #{tpu_custom_call.1} parent=1 // pred_check
      _
    $region3: #{tpu_custom_call.1} parent=1 // pred_check_branch
      %11 = sbr.rel (0) target = $region5
    $region4: #{tpu_custom_call.1} parent=1 // pred_region
      %s13 = ssub.s32 512, 512
      %14 = vsyncadd [#allocation3], %s13
      %s15 = sshll.u32 [#allocation2], 4
      %s16 = int_to_ptr.vmem [resolvable:$true] %s15
      %21 = dma.hbm_to_vmem [thread:$0]  %s0, 512, %s16, [#allocation3], 128, 128, 8
    $region5: #{tpu_custom_call.1} parent=1 // pred_fallthru
      _
    // Predicated region
    $region6: #{tpu_custom_call.1} parent=1 // pred_check
      _
    $region7: #{tpu_custom_call.1} parent=1 // pred_check_branch
      %23 = sbr.rel (0) target = $region9
    $region8: #{tpu_custom_call.1} parent=1 // pred_region
      %s25 = ssub.s32 512, 512
      %26 = vsyncadd [#allocation6], %s25
      %s27 = sshll.u32 [#allocation5], 4
      %s28 = int_to_ptr.vmem [resolvable:$true] %s27
      %33 = dma.hbm_to_vmem [thread:$0]  %s1, 512, %s28, [#allocation6], 128, 128, 8
    $region9: #{tpu_custom_call.1} parent=1 // pred_fallthru
      _
    // Predicated region
    $region10: #{tpu_custom_call.1} parent=1 // pred_check
      _
    $region11: #{tpu_custom_call.1} parent=1 // pred_check_branch
      %35 = sbr.rel (0) target = $region13
    $region12: #{tpu_custom_call.1} parent=1 // pred_region
      %36 = dma.done [#allocation3], 512
    $region13: #{tpu_custom_call.1} parent=1 // pred_fallthru
      _
    // Predicated region
    $region14: #{tpu_custom_call.1} parent=1 // pred_check
      _
    $region15: #{tpu_custom_call.1} parent=1 // pred_check_branch
      %38 = sbr.rel (0) target = $region17
    $region16: #{tpu_custom_call.1} parent=1 // pred_region
      %39 = dma.done [#allocation6], 512
    $region17: #{tpu_custom_call.1} parent=1 // pred_fallthru
      _
    %p40 = scmp.eq.s32.totalorder 0, 0
    // Predicated region
    $region18: #{tpu_custom_call.1} parent=1 // pred_check
      %p41 = pneg %p40
    $region19: #{tpu_custom_call.1} parent=1 // pred_check_branch
      %43 = sbr.rel (%p41) target = $region21
    $region20: #{tpu_custom_call.1} parent=1 // pred_region
      %44 = vst [vmem:[#allocation7] sm:$0xff] 0.0
      %45 = vst [vmem:[#allocation7 + $0x8] sm:$0xff] 0.0
    $region21: #{tpu_custom_call.1} parent=1 // pred_fallthru
      _
    %v46 = vld [vmem:[#allocation2] sm:$0xff]
    %v47 = vld [vmem:[#allocation2 + $0x8] sm:$0xff]
    %v48 = vld [vmem:[#allocation2 + $0x10] sm:$0xff]
    %v49 = vld [vmem:[#allocation2 + $0x18] sm:$0xff]
    %v50 = vld [vmem:[#allocation5] sm:$0xff]
    %v51 = vld [vmem:[#allocation5 + $0x8] sm:$0xff]
    %v52 = vld [vmem:[#allocation5 + $0x10] sm:$0xff]
    %v53 = vld [vmem:[#allocation5 + $0x18] sm:$0xff]
    %vm54 = vcmp.gt.f32.partialorder %v50, 0.0
    %vm55 = vcmp.gt.f32.partialorder %v51, 0.0
    %vm56 = vcmp.gt.f32.partialorder %v52, 0.0
    %vm57 = vcmp.gt.f32.partialorder %v53, 0.0
    %v58 = vmul.f32 %v46, 0.5
    %v59 = vmul.f32 %v47, 0.5
    %v60 = vmul.f32 %v48, 0.5
    %v61 = vmul.f32 %v49, 0.5
    %v62 = vsub.f32 1.0, %v46
    %v63 = vsub.f32 1.0, %v47
    %v64 = vsub.f32 1.0, %v48
    %v65 = vsub.f32 1.0, %v49
    %v66 = vmul.f32 %v62, 0.5
    %v67 = vmul.f32 %v63, 0.5
    %v68 = vmul.f32 %v64, 0.5
    %v69 = vmul.f32 %v65, 0.5
    %v70 = vsel %vm54, %v58, %v66
    %v71 = vsel %vm55, %v59, %v67
    %v72 = vsel %vm56, %v60, %v68
    %v73 = vsel %vm57, %v61, %v69
    %vm74 = vcmask 130048
    %v75 = vsel %vm74, %v70, 0.0
    %76 = vadd.xlane.f32.xlu0 %v75
    %v77 = vpop.xlane.xlu0 %76
    %v78 = vsel %vm74, %v71, 0.0
    %79 = vadd.xlane.f32.xlu0 %v78
    %v80 = vpop.xlane.xlu0 %79
    %v81 = vsel %vm74, %v72, 0.0
    %82 = vadd.xlane.f32.xlu0 %v81
    %v83 = vpop.xlane.xlu0 %82
    %v84 = vsel %vm74, %v73, 0.0
    %85 = vadd.xlane.f32.xlu0 %v84
    %v86 = vpop.xlane.xlu0 %85
    %v87 = vadd.f32 %v77, %v80
    %v88 = vrot.slane %v87, 4
    %v89 = vadd.f32 %v87, %v88
    %v90 = vrot.slane %v89, 2
    %v91 = vadd.f32 %v89, %v90
    %v92 = vrot.slane %v91, 1
    %v93 = vadd.f32 %v91, %v92
    %v94 = vadd.f32 %v83, %v86
    %v95 = vrot.slane %v94, 4
    %v96 = vadd.f32 %v94, %v95
    %v97 = vrot.slane %v96, 2
    %v98 = vadd.f32 %v96, %v97
    %v99 = vrot.slane %v98, 1
    %v100 = vadd.f32 %v98, %v99
    %v101 = vld [vmem:[#allocation7] sm:$0xff]
    %v102 = vld [vmem:[#allocation7 + $0x8] sm:$0xff]
    %v103 = vadd.f32 %v101, %v93
    %v104 = vadd.f32 %v102, %v100
    %105 = vst [vmem:[#allocation7] sm:$0xff] %v103
    %106 = vst [vmem:[#allocation7 + $0x8] sm:$0xff] %v104
    // Predicated region
    $region22: #{tpu_custom_call.1} parent=1 // pred_check
      _
    $region23: #{tpu_custom_call.1} parent=1 // pred_check_branch
      %108 = sbr.rel (0) target = $region25
    $region24: #{tpu_custom_call.1} parent=1 // pred_region
      %s110 = ssub.s32 256, 256
      %111 = vsyncadd [#allocation4], %s110
      %s112 = sshll.u32 [#allocation7], 4
      %s113 = int_to_ptr.vmem [resolvable:$true] %s112
      %118 = dma.vmem_to_hbm [thread:$0]  %s113, 256, %s2, [#allocation4], 128, 128, 8
    $region25: #{tpu_custom_call.1} parent=1 // pred_fallthru
      _
    // Predicated region
    $region26: #{tpu_custom_call.1} parent=1 // pred_check
      _
    $region27: #{tpu_custom_call.1} parent=1 // pred_check_branch
      %120 = sbr.rel (0) target = $region29
    $region28: #{tpu_custom_call.1} parent=1 // pred_region
      %121 = dma.done [#allocation4], 256
    $region29: #{tpu_custom_call.1} parent=1 // pred_fallthru
      _
    %122 = vsyncpa [#allocation3], 1
    %123 = vsyncpa [#allocation6], 1
    %124 = vsyncpa [#allocation4], 1

</llo_original>
